<compile_context>
chip_gen: v7x
topology: tpu7x:2x2x1
jax: 0.10.0
libtpu: 0.0.40
codegen_flags: <defaults>
</compile_context>

<pallas_src>
import jax
import jax.numpy as jnp
from jax.experimental import pallas as pl
from jax.experimental.pallas import tpu as pltpu
import numpy as np

# Index conventions (host glue side):
#   obj: cube=0, sphere=1, cylinder=2        -> one-hot at column (2 - idx) [cols 0..2]
#   rel: front=0, behind=1, left=2, right=3  -> one-hot at column (6 - idx) [cols 3..6]
#   obj (second):                               one-hot at column (9 - idx) [cols 7..9]
OBJ2IDX = {"cube": 0, "sphere": 1, "cylinder": 2}
REL2IDX = {"front": 0, "behind": 1, "left": 2, "right": 3}

_OUT_WIDTH = 10
# ~4 KiB of lane-padded VMEM per row across input+output double buffers;
# 4096 rows ~= 16 MiB -> safe on v5e (16 MiB scoped default) and v7x (64 MiB),
# while big enough to amortize the ~0.35 us per-grid-step overhead.
_MAX_TILE = 4096


def _round_up(x, m):
    return ((x + m - 1) // m) * m


def sym_kernel(packed_ref, out_ref):
    tile, width = out_ref.shape                 # (TILE, 10)
    packed = packed_ref[...]                    # (TILE, 1) int32 = a | (r<<2) | (b<<4)
    a = packed & 3
    r = (packed >> 2) & 3
    b = (packed >> 4) & 3
    cols = jax.lax.broadcasted_iota(jnp.int32, (tile, width), 1)
    # Target columns live in disjoint ranges [0,2], [3,6], [7,9] -> OR is collision-free.
    onehot = (cols == (2 - a)) | (cols == (6 - r)) | (cols == (9 - b))
    out_ref[...] = onehot.astype(jnp.float32)


def sym_pallas(packed_idx):
    """packed_idx: (N_pad, 1) int32, N_pad a multiple of 8 (and of the tile size).

    Returns (N_pad, 10) float32 of concatenated one-hot rows."""
    n = packed_idx.shape[0]
    tile = min(_MAX_TILE, n)
    assert n % tile == 0 and tile % 8 == 0, (n, tile)
    grid = (n // tile,)
    return pl.pallas_call(
        sym_kernel,
        out_shape=jax.ShapeDtypeStruct((n, _OUT_WIDTH), jnp.float32),
        grid=grid,
        in_specs=[
            pl.BlockSpec((tile, 1), lambda i: (i, 0),
                         memory_space=pltpu.MemorySpace.VMEM),
        ],
        out_specs=pl.BlockSpec((tile, _OUT_WIDTH), lambda i: (i, 0),
                               memory_space=pltpu.MemorySpace.VMEM),
        compiler_params=pltpu.CompilerParams(
            dimension_semantics=("parallel",)),
    )(packed_idx)


def sym_forward(texts):
    """Equivalent of Sym.forward: texts is list[list[str]] of '<obj> <rel> <obj>'."""
    packed = []
    for text_batch in texts:
        for text in text_batch:
            a, r, b = text.split()
            packed.append(OBJ2IDX[a] | (REL2IDX[r] << 2) | (OBJ2IDX[b] << 4))
    n = len(packed)
    if n == 0:
        return jnp.zeros((0, _OUT_WIDTH), dtype=jnp.float32)

    # Pad row count to a multiple of the tile size (tile itself a multiple of 8).
    if n > _MAX_TILE:
        tile = _MAX_TILE
    else:
        tile = _round_up(n, 8)
    n_pad = _round_up(n, tile)

    # One contiguous host array -> a single H2D transfer.
    arr = np.zeros((n_pad, 1), dtype=np.int32)
    arr[:n, 0] = np.asarray(packed, dtype=np.int32)

    out = sym_pallas(jnp.asarray(arr))
    return out[:n]


def sym_reference(texts):
    """Pure-numpy reference matching the PyTorch module exactly."""
    obj2sym = {"cube": [0, 0, 1], "sphere": [0, 1, 0], "cylinder": [1, 0, 0]}
    rel2sym = {"front": [0, 0, 0, 1], "behind": [0, 0, 1, 0],
               "left": [0, 1, 0, 0], "right": [1, 0, 0, 0]}
    rows = []
    for text_batch in texts:
        for text in text_batch:
            a, r, b = text.split()
            rows.append(obj2sym[a] + rel2sym[r] + obj2sym[b])
    return np.asarray(rows, dtype=np.float32).reshape(-1, 10)


if __name__ == "__main__":
    # Deterministic synthetic "texts": batch=2, seq=8 triples per batch.
    key = jax.random.PRNGKey(0)
    objs = ["cube", "sphere", "cylinder"]
    rels = ["front", "behind", "left", "right"]
    batch, seq = 2, 8
    ka, kr, kb = jax.random.split(key, 3)
    a_ids = np.asarray(jax.random.randint(ka, (batch, seq), 0, 3))
    r_ids = np.asarray(jax.random.randint(kr, (batch, seq), 0, 4))
    b_ids = np.asarray(jax.random.randint(kb, (batch, seq), 0, 3))
    texts = [
        [f"{objs[a_ids[i, j]]} {rels[r_ids[i, j]]} {objs[b_ids[i, j]]}"
         for j in range(seq)]
        for i in range(batch)
    ]

    out = sym_forward(texts)
    out = jax.block_until_ready(out)

    ref = sym_reference(texts)
    np.testing.assert_allclose(np.asarray(out), ref, atol=0, rtol=0)
    assert out.shape == (batch * seq, 10) and out.dtype == jnp.float32

    # Larger, non-multiple-of-tile sanity check (exercises padding + multi-tile grid).
    big_batch, big_seq = 3, 37   # N = 111, not a multiple of 8
    ka2, kr2, kb2 = jax.random.split(jax.random.PRNGKey(1), 3)
    a2 = np.asarray(jax.random.randint(ka2, (big_batch, big_seq), 0, 3))
    r2 = np.asarray(jax.random.randint(kr2, (big_batch, big_seq), 0, 4))
    b2 = np.asarray(jax.random.randint(kb2, (big_batch, big_seq), 0, 3))
    texts2 = [
        [f"{objs[a2[i, j]]} {rels[r2[i, j]]} {objs[b2[i, j]]}"
         for j in range(big_seq)]
        for i in range(big_batch)
    ]
    out2 = jax.block_until_ready(sym_forward(texts2))
    np.testing.assert_allclose(np.asarray(out2), sym_reference(texts2), atol=0, rtol=0)

    print("KERNEL_OK")
</pallas_src>

<mosaic_0001>
module attributes {stable_mosaic.version = 11 : i64} {
  func.func @sym_kernel(%arg0: i32, %arg1: memref<16x1xi32, #tpu.memory_space<vmem>>, %arg2: memref<16x10xf32, #tpu.memory_space<vmem>>) attributes {dimension_semantics = [#tpu.dimension_semantics<parallel>], iteration_bounds = array<i64: 1>, scalar_prefetch = 0 : i64, scratch_operands = 0 : i64, tpu.core_type = #tpu.core_type<tc>, window_params = [{transform_indices = @transform_0, window_bounds = array<i64: 16, 1>}, {transform_indices = @transform_1, window_bounds = array<i64: 16, 10>}]} {
    %c0 = arith.constant 0 : index
    %c0_0 = arith.constant 0 : index
    %0 = vector.load %arg1[%c0, %c0_0] : memref<16x1xi32, #tpu.memory_space<vmem>>, vector<16x1xi32>
    %c3_i32 = arith.constant 3 : i32
    %1 = vector.broadcast %c3_i32 : i32 to vector<16x1xi32>
    %2 = arith.andi %0, %1 : vector<16x1xi32>
    %c2_i32 = arith.constant 2 : i32
    %3 = vector.broadcast %c2_i32 : i32 to vector<16x1xi32>
    %4 = arith.shrsi %0, %3 : vector<16x1xi32>
    %c3_i32_1 = arith.constant 3 : i32
    %5 = vector.broadcast %c3_i32_1 : i32 to vector<16x1xi32>
    %6 = arith.andi %4, %5 : vector<16x1xi32>
    %c4_i32 = arith.constant 4 : i32
    %7 = vector.broadcast %c4_i32 : i32 to vector<16x1xi32>
    %8 = arith.shrsi %0, %7 : vector<16x1xi32>
    %c3_i32_2 = arith.constant 3 : i32
    %9 = vector.broadcast %c3_i32_2 : i32 to vector<16x1xi32>
    %10 = arith.andi %8, %9 : vector<16x1xi32>
    %11 = tpu.iota {dimensions = array<i32: 1>} : vector<16x10xi32>
    %c2_i32_3 = arith.constant 2 : i32
    %12 = vector.broadcast %c2_i32_3 : i32 to vector<16x1xi32>
    %13 = arith.subi %12, %2 : vector<16x1xi32>
    %14 = vector.broadcast %13 : vector<16x1xi32> to vector<16x10xi32>
    %15 = arith.cmpi eq, %11, %14 : vector<16x10xi32>
    %c6_i32 = arith.constant 6 : i32
    %16 = vector.broadcast %c6_i32 : i32 to vector<16x1xi32>
    %17 = arith.subi %16, %6 : vector<16x1xi32>
    %18 = vector.broadcast %17 : vector<16x1xi32> to vector<16x10xi32>
    %19 = arith.cmpi eq, %11, %18 : vector<16x10xi32>
    %20 = arith.ori %15, %19 : vector<16x10xi1>
    %c9_i32 = arith.constant 9 : i32
    %21 = vector.broadcast %c9_i32 : i32 to vector<16x1xi32>
    %22 = arith.subi %21, %10 : vector<16x1xi32>
    %23 = vector.broadcast %22 : vector<16x1xi32> to vector<16x10xi32>
    %24 = arith.cmpi eq, %11, %23 : vector<16x10xi32>
    %25 = arith.ori %20, %24 : vector<16x10xi1>
    %26 = arith.extui %25 : vector<16x10xi1> to vector<16x10xi32>
    %27 = arith.sitofp %26 : vector<16x10xi32> to vector<16x10xf32>
    %c0_4 = arith.constant 0 : index
    %c0_5 = arith.constant 0 : index
    %28 = vector.load %arg2[%c0_4, %c0_5] : memref<16x10xf32, #tpu.memory_space<vmem>>, vector<16x10xf32>
    tpu.vector_store %arg2[%c0_4, %c0_5], %27 {strides = array<i32>} : memref<16x10xf32, #tpu.memory_space<vmem>>, vector<16x10xf32>,
    return
  }
  func.func @transform_0(%arg0: i32) -> (i32, i32) {
    %c0_i32 = arith.constant 0 : i32
    %c0_i32_0 = arith.constant 0 : i32
    return %arg0, %c0_i32 : i32, i32
  }
  func.func @transform_1(%arg0: i32) -> (i32, i32) {
    %c0_i32 = arith.constant 0 : i32
    %c0_i32_0 = arith.constant 0 : i32
    return %arg0, %c0_i32 : i32, i32
  }
}

</mosaic_0001>

<llo_original>
// kernel: tpu_custom_call.1
$region0: #{tpu_custom_call.1}
  #allocation0 [shape = 'u32[]', space=smem, size = 0x4, offset = 0x4, fixed_abs, tag = 'smem constant byte address 0x4 - core index']
  #allocation1 [shape = 'u32[144,128]{1,0:T(1,128)}', space=vmem, size = 0x12000, scoped, tag = 'internal scratch']
  %s0 = inlined_call_operand.vmem [shape: s32[16,1], index: 0, kind: input, shape index: {}]
  %s1 = inlined_call_operand.hbm [shape: f32[16,10], index: 1, kind: output, shape index: {}]
  %s2 = sld [smem:[#allocation0]]
  $region14: #{tpu_custom_call.1} parent=0
    _
  %s4 = ssub.s32 1, %s2
  %s5 = scalar_select 0, %s4, %s2
  $region1: #{tpu_custom_call.1} parent=0
    #allocation2 [shape = 'u8[8192]{0}', space=vmem, size = 0x2000, scoped, tag = 'output window, operand 0, single buffered']
    #allocation3 [shape = 's32[1]{0}', space=sflag, size = 0x4, scoped, tag = 'scoped memory for tpu_custom_call.1']
    %6 = vsyncpa [#allocation3], 0
    // Predicated region
    $region2: #{tpu_custom_call.1} parent=1 // pred_check
      _
    $region3: #{tpu_custom_call.1} parent=1 // pred_check_branch
      %8 = sbr.rel (0) target = $region5
    $region4: #{tpu_custom_call.1} parent=1 // pred_region
      _
    $region5: #{tpu_custom_call.1} parent=1 // pred_fallthru
      _
    %v9 = vld [vmem:[%s0] sm:$0xff]
    %v10 = vld [vmem:[%s0 + $0x8] sm:$0xff]
    %v11 = vand.u32 %v9, 3
    %v12 = vand.u32 %v10, 3
    %v13 = vshra.s32 %v9, 2
    %v14 = vshra.s32 %v10, 2
    %v15 = vand.u32 %v13, 3
    %v16 = vand.u32 %v14, 3
    %v17 = vshra.s32 %v9, 4
    %v18 = vshra.s32 %v10, 4
    %v19 = vand.u32 %v17, 3
    %v20 = vand.u32 %v18, 3
    %v21 = vlaneseq
    %v22 = vand.u32 %v21, 127
    %v23 = vsub.s32 2, %v11
    %v24 = vsub.s32 2, %v12
    %25 = vset.pattern.permute.xlu0 0
    %26 = vperm.xlu0 %25, %v23
    %v27 = vpop.permute.xlu0 %26
    %28 = vset.pattern.permute.xlu0 0
    %29 = vperm.xlu0 %28, %v24
    %v30 = vpop.permute.xlu0 %29
    %vm31 = vcmp.eq.s32.totalorder %v22, %v27
    %vm32 = vcmp.eq.s32.totalorder %v22, %v30
    %v33 = vsub.s32 6, %v15
    %v34 = vsub.s32 6, %v16
    %35 = vset.pattern.permute.xlu0 0
    %36 = vperm.xlu0 %35, %v33
    %v37 = vpop.permute.xlu0 %36
    %38 = vset.pattern.permute.xlu0 0
    %39 = vperm.xlu0 %38, %v34
    %v40 = vpop.permute.xlu0 %39
    %vm41 = vcmp.eq.s32.totalorder %v22, %v37
    %vm42 = vcmp.eq.s32.totalorder %v22, %v40
    %vm43 = vmor %vm31, %vm41
    %vm44 = vmor %vm32, %vm42
    %v45 = vsub.s32 9, %v19
    %v46 = vsub.s32 9, %v20
    %47 = vset.pattern.permute.xlu0 0
    %48 = vperm.xlu0 %47, %v45
    %v49 = vpop.permute.xlu0 %48
    %50 = vset.pattern.permute.xlu0 0
    %51 = vperm.xlu0 %50, %v46
    %v52 = vpop.permute.xlu0 %51
    %vm53 = vcmp.eq.s32.totalorder %v22, %v49
    %vm54 = vcmp.eq.s32.totalorder %v22, %v52
    %vm55 = vmor %vm43, %vm53
    %vm56 = vmor %vm44, %vm54
    %v57 = vsel %vm55, 1, 0
    %v58 = vsel %vm56, 1, 0
    %v59 = vcvt.s32.f32 %v57
    %v60 = vcvt.s32.f32 %v58
    %vm61 = vcmask 80896
    %62 = vst.msk [vmem:[#allocation2] sm:$0xff] %vm61, %v59
    %63 = vst.msk [vmem:[#allocation2 + $0x8] sm:$0xff] %vm61, %v60
    // Predicated region
    $region6: #{tpu_custom_call.1} parent=1 // pred_check
      _
    $region7: #{tpu_custom_call.1} parent=1 // pred_check_branch
      %65 = sbr.rel (0) target = $region9
    $region8: #{tpu_custom_call.1} parent=1 // pred_region
      %s67 = ssub.s32 256, 256
      %68 = vsyncadd [#allocation3], %s67
      %s69 = sshll.u32 [#allocation2], 4
      %s70 = int_to_ptr.vmem [resolvable:$true] %s69
      %75 = dma.vmem_to_hbm [thread:$0]  %s70, 256, %s1, [#allocation3], 128, 128, 8
    $region9: #{tpu_custom_call.1} parent=1 // pred_fallthru
      _
    // Predicated region
    $region10: #{tpu_custom_call.1} parent=1 // pred_check
      _
    $region11: #{tpu_custom_call.1} parent=1 // pred_check_branch
      %77 = sbr.rel (0) target = $region13
    $region12: #{tpu_custom_call.1} parent=1 // pred_region
      %78 = dma.done [#allocation3], 256
    $region13: #{tpu_custom_call.1} parent=1 // pred_fallthru
      _
    %79 = vsyncpa [#allocation3], 1

</llo_original>
